<compile_context>
chip_gen: v7x
topology: tpu7x:2x2x1
jax: 0.10.0
libtpu: 0.0.40
codegen_flags: <defaults>
</compile_context>

<pallas_src>
import math

import jax
import jax.numpy as jnp
from jax.experimental import pallas as pl
from jax.experimental.pallas import tpu as pltpu


def cbam_kernel(x_ref, w1t_ref, w2t_ref, msp_ref, o_ref):
    # x_ref:  (Nb, C, H*W)  VMEM, lane-dense on H*W
    # w1t_ref: (C, C//8)    VMEM  (fc conv1 weight, transposed)
    # w2t_ref: (C//8, C)    VMEM  (fc conv2 weight, transposed)
    # msp_ref: (2, H*W, H*W) VMEM (7x7 SAME conv folded to a Toeplitz operator)
    x = x_ref[...].astype(jnp.float32)                 # (Nb, C, HW)
    nb = x.shape[0]

    # ---------------- Channel attention ----------------
    avg = jnp.mean(x, axis=2)                          # (Nb, C)  lane reduce
    mx = jnp.max(x, axis=2)                            # (Nb, C)
    pooled = jnp.concatenate([avg, mx], axis=0)        # (2*Nb, C) -> one FC pass
    h = jnp.maximum(
        jnp.dot(pooled, w1t_ref[...], preferred_element_type=jnp.float32), 0.0)
    fc = jnp.dot(h, w2t_ref[...], preferred_element_type=jnp.float32)  # (2*Nb, C)
    ca = jax.nn.sigmoid(fc[:nb] + fc[nb:])             # (Nb, C)
    x_ca = x * ca[:, :, None]                          # (Nb, C, HW)

    # ---------------- Spatial attention ----------------
    ch_avg = jnp.mean(x_ca, axis=1)                    # (Nb, HW) sublane reduce
    ch_max = jnp.max(x_ca, axis=1)                     # (Nb, HW)
    logits = (jnp.dot(ch_avg, msp_ref[0], preferred_element_type=jnp.float32)
              + jnp.dot(ch_max, msp_ref[1], preferred_element_type=jnp.float32))
    sa = jax.nn.sigmoid(logits)                        # (Nb, HW)

    o_ref[...] = (x_ca * sa[:, None, :]).astype(o_ref.dtype)


def build_spatial_matrix(wsp, H, W):
    """Fold the 2->1 channel KxK SAME conv (cross-correlation, zero pad) into a
    dense (2, H*W, H*W) operator so the kernel can apply it as a matmul.

    out[n, yo*W+xo] = sum_{c, yi, xi} in[c, n, yi*W+xi] * M[c, yi*W+xi, yo*W+xo]
    with M[c, (yi,xi), (yo,xo)] = w[0, c, yi-yo+p, xi-xo+p] when in range else 0.
    """
    # TODO(synk): for large H*W this operator is O((H*W)^2) memory; switch to a
    # roll-based 49-tap loop inside the kernel at that scale.
    K = wsp.shape[-1]
    p = K // 2
    dy = jnp.arange(H)[:, None] - jnp.arange(H)[None, :] + p   # ky = yi - yo + p
    dx = jnp.arange(W)[:, None] - jnp.arange(W)[None, :] + p   # kx = xi - xo + p
    vy = (dy >= 0) & (dy < K)
    vx = (dx >= 0) & (dx < K)
    g = wsp[0][:, jnp.clip(dy, 0, K - 1)][:, :, :, jnp.clip(dx, 0, K - 1)]
    # g axes: (c, yi, yo, xi, xo)
    g = g * (vy[None, :, :, None, None] & vx[None, None, None, :, :]).astype(wsp.dtype)
    g = jnp.transpose(g, (0, 1, 3, 2, 4)).reshape(2, H * W, H * W)
    return g


def cbam_pallas(x, w1, w2, wsp, block_n=None):
    """x: (N, C, H, W) f32.  w1: (C//8, C).  w2: (C, C//8).  wsp: (1, 2, 7, 7)."""
    N, C, H, W = x.shape
    HW = H * W
    Cr = w1.shape[0]

    if block_n is None:
        # Amortize per-grid-step overhead: batch as many N as fit a ~512 KiB block.
        per_n = C * HW * x.dtype.itemsize
        cap = max(1, (512 * 1024) // per_n)
        block_n = 1
        for d in range(1, N + 1):
            if N % d == 0 and d <= cap:
                block_n = d
    assert N % block_n == 0

    xf = x.reshape(N, C, HW)                   # lane-dense last dim (free reshape)
    w1t = jnp.transpose(w1)                    # (C, Cr)
    w2t = jnp.transpose(w2)                    # (Cr, C)
    msp = build_spatial_matrix(wsp, H, W)      # (2, HW, HW)

    out = pl.pallas_call(
        cbam_kernel,
        out_shape=jax.ShapeDtypeStruct((N, C, HW), x.dtype),
        grid=(N // block_n,),
        in_specs=[
            pl.BlockSpec((block_n, C, HW), lambda n: (n, 0, 0)),
            pl.BlockSpec((C, Cr), lambda n: (0, 0)),
            pl.BlockSpec((Cr, C), lambda n: (0, 0)),
            pl.BlockSpec((2, HW, HW), lambda n: (0, 0, 0)),
        ],
        out_specs=pl.BlockSpec((block_n, C, HW), lambda n: (n, 0, 0)),
        compiler_params=pltpu.CompilerParams(
            dimension_semantics=("parallel",)),
    )(xf, w1t, w2t, msp)
    return out.reshape(N, C, H, W)


def cbam_reference(x, w1, w2, wsp):
    """Pure-JAX reference matching the PyTorch module."""
    avg = jnp.mean(x, axis=(2, 3))                 # (N, C)
    mx = jnp.max(x, axis=(2, 3))                   # (N, C)

    def fc(v):
        h = jax.nn.relu(v @ w1.T)                  # (N, Cr)
        return h @ w2.T                            # (N, C)

    ca = jax.nn.sigmoid(fc(avg) + fc(mx))
    x1 = x * ca[:, :, None, None]

    ch_avg = jnp.mean(x1, axis=1, keepdims=True)
    ch_max = jnp.max(x1, axis=1, keepdims=True)
    m = jnp.concatenate([ch_avg, ch_max], axis=1)  # (N, 2, H, W)
    conv = jax.lax.conv_general_dilated(
        m, wsp, window_strides=(1, 1), padding="SAME",
        dimension_numbers=("NCHW", "OIHW", "NCHW"))
    return x1 * jax.nn.sigmoid(conv)


if __name__ == "__main__":
    # Small shapes consistent with the module: in_channels must be divisible by ratio=8.
    N, C, H, W = 2, 16, 16, 16
    Cr = C // 8

    key = jax.random.PRNGKey(0)
    kx, k1, k2, k3 = jax.random.split(key, 4)

    x = jax.random.normal(kx, (N, C, H, W), dtype=jnp.float32)

    # Deterministic kaiming_normal_(mode='fan_out', nonlinearity='relu') init:
    # std = sqrt(2 / fan_out), fan_out = out_ch * kH * kW.
    w1 = jax.random.normal(k1, (Cr, C), dtype=jnp.float32) * math.sqrt(2.0 / Cr)
    w2 = jax.random.normal(k2, (C, Cr), dtype=jnp.float32) * math.sqrt(2.0 / C)
    wsp = jax.random.normal(k3, (1, 2, 7, 7), dtype=jnp.float32) * math.sqrt(2.0 / 49.0)

    out = cbam_pallas(x, w1, w2, wsp)
    out = jax.block_until_ready(out)

    ref = cbam_reference(x, w1, w2, wsp)
    assert out.shape == ref.shape and out.dtype == ref.dtype
    assert jnp.allclose(out, ref, rtol=1e-4, atol=1e-4), (
        f"max abs err = {jnp.max(jnp.abs(out - ref))}")

    print("KERNEL_OK")
</pallas_src>

<mosaic_0001>
module attributes {stable_mosaic.version = 11 : i64} {
  func.func @cbam_kernel(%arg0: i32, %arg1: memref<2x16x256xf32, #tpu.memory_space<vmem>>, %arg2: memref<16x2xf32, #tpu.memory_space<vmem>>, %arg3: memref<2x16xf32, #tpu.memory_space<vmem>>, %arg4: memref<2x256x256xf32, #tpu.memory_space<vmem>>, %arg5: memref<2x16x256xf32, #tpu.memory_space<vmem>>) attributes {dimension_semantics = [#tpu.dimension_semantics<parallel>], iteration_bounds = array<i64: 1>, scalar_prefetch = 0 : i64, scratch_operands = 0 : i64, tpu.core_type = #tpu.core_type<tc>, window_params = [{transform_indices = @transform_0, window_bounds = array<i64: 2, 16, 256>}, {pipeline_mode = #tpu.pipeline_mode<synchronous>, transform_indices = @transform_1, window_bounds = array<i64: 16, 2>}, {pipeline_mode = #tpu.pipeline_mode<synchronous>, transform_indices = @transform_2, window_bounds = array<i64: 2, 16>}, {pipeline_mode = #tpu.pipeline_mode<synchronous>, transform_indices = @transform_3, window_bounds = array<i64: 2, 256, 256>}, {transform_indices = @transform_4, window_bounds = array<i64: 2, 16, 256>}]} {
    %c0 = arith.constant 0 : index
    %c0_0 = arith.constant 0 : index
    %c0_1 = arith.constant 0 : index
    %0 = vector.load %arg1[%c0, %c0_0, %c0_1] : memref<2x16x256xf32, #tpu.memory_space<vmem>>, vector<2x16x256xf32>
    %cst = arith.constant dense<0.000000e+00> : vector<2x16xf32>
    %1 = vector.multi_reduction <add>, %0, %cst [2] : vector<2x16x256xf32> to vector<2x16xf32>
    %cst_2 = arith.constant 2.560000e+02 : f32
    %2 = vector.broadcast %cst_2 : f32 to vector<2x16xf32>
    %3 = arith.divf %1, %2 : vector<2x16xf32>
    %cst_3 = arith.constant dense<0xFF800000> : vector<2x16xf32>
    %4 = vector.multi_reduction <maximumf>, %0, %cst_3 [2] : vector<2x16x256xf32> to vector<2x16xf32>
    %5 = tpu.concatenate %3, %4 in 0 : vector<2x16xf32>, vector<2x16xf32> -> vector<4x16xf32>
    %c0_4 = arith.constant 0 : index
    %c0_5 = arith.constant 0 : index
    %6 = vector.load %arg2[%c0_4, %c0_5] : memref<16x2xf32, #tpu.memory_space<vmem>>, vector<16x2xf32>
    %cst_6 = arith.constant dense<0.000000e+00> : vector<4x2xf32>
    %7 = tpu.matmul %5, %6, %cst_6 {dimension_numbers = #tpu.dot_dimension_numbers<[1], [0], [0], [1], [0, 0, 1, 1], [], []>} : vector<4x16xf32>, vector<16x2xf32>, vector<4x2xf32> -> vector<4x2xf32>
    %cst_7 = arith.constant 0.000000e+00 : f32
    %8 = vector.broadcast %cst_7 : f32 to vector<4x2xf32>
    %9 = arith.maximumf %7, %8 : vector<4x2xf32>
    %c0_8 = arith.constant 0 : index
    %c0_9 = arith.constant 0 : index
    %10 = vector.load %arg3[%c0_8, %c0_9] : memref<2x16xf32, #tpu.memory_space<vmem>>, vector<2x16xf32>
    %cst_10 = arith.constant dense<0.000000e+00> : vector<4x16xf32>
    %11 = tpu.matmul %9, %10, %cst_10 {dimension_numbers = #tpu.dot_dimension_numbers<[1], [0], [0], [1], [0, 0, 1, 1], [], []>} : vector<4x2xf32>, vector<2x16xf32>, vector<4x16xf32> -> vector<4x16xf32>
    %12 = vector.extract_strided_slice %11 {offsets = [0, 0], sizes = [2, 16], strides = [1, 1]} : vector<4x16xf32> to vector<2x16xf32>
    %13 = vector.extract_strided_slice %11 {offsets = [2, 0], sizes = [2, 16], strides = [1, 1]} : vector<4x16xf32> to vector<2x16xf32>
    %14 = arith.addf %12, %13 : vector<2x16xf32>
    %15 = arith.negf %14 : vector<2x16xf32>
    %16 = math.exp %15 : vector<2x16xf32>
    %cst_11 = arith.constant 1.000000e+00 : f32
    %17 = vector.broadcast %cst_11 : f32 to vector<2x16xf32>
    %18 = arith.addf %17, %16 : vector<2x16xf32>
    %19 = arith.divf %17, %18 : vector<2x16xf32>
    %20 = vector.shape_cast %19 : vector<2x16xf32> to vector<2x16x1xf32>
    %21 = vector.broadcast %20 : vector<2x16x1xf32> to vector<2x16x256xf32>
    %22 = arith.mulf %0, %21 : vector<2x16x256xf32>
    %cst_12 = arith.constant dense<0.000000e+00> : vector<2x256xf32>
    %23 = vector.multi_reduction <add>, %22, %cst_12 [1] : vector<2x16x256xf32> to vector<2x256xf32>
    %cst_13 = arith.constant 1.600000e+01 : f32
    %24 = vector.broadcast %cst_13 : f32 to vector<2x256xf32>
    %25 = arith.divf %23, %24 : vector<2x256xf32>
    %cst_14 = arith.constant dense<0xFF800000> : vector<2x256xf32>
    %26 = vector.multi_reduction <maximumf>, %22, %cst_14 [1] : vector<2x16x256xf32> to vector<2x256xf32>
    %c0_15 = arith.constant 0 : index
    %c0_16 = arith.constant 0 : index
    %c0_17 = arith.constant 0 : index
    %27 = vector.load %arg4[%c0_15, %c0_16, %c0_17] : memref<2x256x256xf32, #tpu.memory_space<vmem>>, vector<1x256x256xf32>
    %28 = vector.shape_cast %27 : vector<1x256x256xf32> to vector<256x256xf32>
    %cst_18 = arith.constant dense<0.000000e+00> : vector<2x256xf32>
    %29 = tpu.matmul %25, %28, %cst_18 {dimension_numbers = #tpu.dot_dimension_numbers<[1], [0], [0], [1], [0, 0, 1, 1], [], []>} : vector<2x256xf32>, vector<256x256xf32>, vector<2x256xf32> -> vector<2x256xf32>
    %c1 = arith.constant 1 : index
    %c0_19 = arith.constant 0 : index
    %c0_20 = arith.constant 0 : index
    %30 = vector.load %arg4[%c1, %c0_19, %c0_20] : memref<2x256x256xf32, #tpu.memory_space<vmem>>, vector<1x256x256xf32>
    %31 = vector.shape_cast %30 : vector<1x256x256xf32> to vector<256x256xf32>
    %cst_21 = arith.constant dense<0.000000e+00> : vector<2x256xf32>
    %32 = tpu.matmul %26, %31, %cst_21 {dimension_numbers = #tpu.dot_dimension_numbers<[1], [0], [0], [1], [0, 0, 1, 1], [], []>} : vector<2x256xf32>, vector<256x256xf32>, vector<2x256xf32> -> vector<2x256xf32>
    %33 = arith.addf %29, %32 : vector<2x256xf32>
    %34 = arith.negf %33 : vector<2x256xf32>
    %35 = math.exp %34 : vector<2x256xf32>
    %cst_22 = arith.constant 1.000000e+00 : f32
    %36 = vector.broadcast %cst_22 : f32 to vector<2x256xf32>
    %37 = arith.addf %36, %35 : vector<2x256xf32>
    %38 = arith.divf %36, %37 : vector<2x256xf32>
    %39 = vector.shape_cast %38 : vector<2x256xf32> to vector<2x1x256xf32>
    %40 = vector.broadcast %39 : vector<2x1x256xf32> to vector<2x16x256xf32>
    %41 = arith.mulf %22, %40 : vector<2x16x256xf32>
    %c0_23 = arith.constant 0 : index
    %c0_24 = arith.constant 0 : index
    %c0_25 = arith.constant 0 : index
    %42 = vector.load %arg5[%c0_23, %c0_24, %c0_25] : memref<2x16x256xf32, #tpu.memory_space<vmem>>, vector<2x16x256xf32>
    tpu.vector_store %arg5[%c0_23, %c0_24, %c0_25], %41 {strides = array<i32>} : memref<2x16x256xf32, #tpu.memory_space<vmem>>, vector<2x16x256xf32>,
    return
  }
  func.func @transform_0(%arg0: i32) -> (i32, i32, i32) {
    %c0_i32 = arith.constant 0 : i32
    %c0_i32_0 = arith.constant 0 : i32
    %c0_i32_1 = arith.constant 0 : i32
    return %arg0, %c0_i32, %c0_i32_0 : i32, i32, i32
  }
  func.func @transform_1(%arg0: i32) -> (i32, i32) {
    %c0_i32 = arith.constant 0 : i32
    %c0_i32_0 = arith.constant 0 : i32
    %c0_i32_1 = arith.constant 0 : i32
    return %c0_i32, %c0_i32_0 : i32, i32
  }
  func.func @transform_2(%arg0: i32) -> (i32, i32) {
    %c0_i32 = arith.constant 0 : i32
    %c0_i32_0 = arith.constant 0 : i32
    %c0_i32_1 = arith.constant 0 : i32
    return %c0_i32, %c0_i32_0 : i32, i32
  }
  func.func @transform_3(%arg0: i32) -> (i32, i32, i32) {
    %c0_i32 = arith.constant 0 : i32
    %c0_i32_0 = arith.constant 0 : i32
    %c0_i32_1 = arith.constant 0 : i32
    %c0_i32_2 = arith.constant 0 : i32
    return %c0_i32, %c0_i32_0, %c0_i32_1 : i32, i32, i32
  }
  func.func @transform_4(%arg0: i32) -> (i32, i32, i32) {
    %c0_i32 = arith.constant 0 : i32
    %c0_i32_0 = arith.constant 0 : i32
    %c0_i32_1 = arith.constant 0 : i32
    return %arg0, %c0_i32, %c0_i32_0 : i32, i32, i32
  }
}

</mosaic_0001>

<llo_original>
// kernel: tpu_custom_call.1
$region0: #{tpu_custom_call.1}
  #allocation0 [shape = 'u32[]', space=smem, size = 0x4, offset = 0x4, fixed_abs, tag = 'smem constant byte address 0x4 - core index']
  #allocation1 [shape = 'u32[144,128]{1,0:T(1,128)}', space=vmem, size = 0x12000, scoped, tag = 'internal scratch']
  %s0 = inlined_call_operand.hbm [shape: f32[2,16,256], index: 0, kind: input, shape index: {}]
  %s1 = inlined_call_operand.vmem [shape: f32[16,2], index: 1, kind: input, shape index: {}]
  %s2 = inlined_call_operand.vmem [shape: f32[2,16], index: 2, kind: input, shape index: {}]
  %s3 = inlined_call_operand.hbm [shape: f32[2,256,256], index: 3, kind: input, shape index: {}]
  %s4 = inlined_call_operand.hbm [shape: f32[2,16,256], index: 4, kind: output, shape index: {}]
  %s5 = sld [smem:[#allocation0]]
  $region34: #{tpu_custom_call.1} parent=0
    _
  %s7 = ssub.s32 1, %s5
  %s8 = scalar_select 0, %s7, %s5
  $region1: #{tpu_custom_call.1} parent=0
    #allocation2 [shape = 'u8[32768]{0}', space=vmem, size = 0x8000, scoped, tag = 'input window, operand 0, single buffered']
    #allocation3 [shape = 's32[1]{0}', space=sflag, size = 0x4, scoped, tag = 'scoped memory for tpu_custom_call.1']
    #allocation4 [shape = 's32[1]{0}', space=sflag, size = 0x4, scoped, tag = 'scoped memory for tpu_custom_call.1']
    #allocation5 [shape = 'u8[524288]{0}', space=vmem, size = 0x80000, scoped, tag = 'input window, operand 3, single buffered']
    #allocation6 [shape = 's32[1]{0}', space=sflag, size = 0x4, scoped, tag = 'scoped memory for tpu_custom_call.1']
    #allocation7 [shape = 'u8[32768]{0}', space=vmem, size = 0x8000, scoped, tag = 'output window, operand 0, single buffered']
    %9 = vsyncpa [#allocation3], 0
    %10 = vsyncpa [#allocation6], 0
    %11 = vsyncpa [#allocation4], 0
    // Predicated region
    $region2: #{tpu_custom_call.1} parent=1 // pred_check
      _
    $region3: #{tpu_custom_call.1} parent=1 // pred_check_branch
      %13 = sbr.rel (0) target = $region5
    $region4: #{tpu_custom_call.1} parent=1 // pred_region
      %s15 = ssub.s32 1024, 1024
      %16 = vsyncadd [#allocation3], %s15
      %s17 = sshll.u32 [#allocation2], 4
      %s18 = int_to_ptr.vmem [resolvable:$true] %s17
      %23 = dma.hbm_to_vmem [thread:$0]  %s0, 1024, %s18, [#allocation3], 256, 256, 16
    $region5: #{tpu_custom_call.1} parent=1 // pred_fallthru
      _
    // Predicated region
    $region6: #{tpu_custom_call.1} parent=1 // pred_check
      _
    $region7: #{tpu_custom_call.1} parent=1 // pred_check_branch
      %25 = sbr.rel (0) target = $region9
    $region8: #{tpu_custom_call.1} parent=1 // pred_region
      _
    $region9: #{tpu_custom_call.1} parent=1 // pred_fallthru
      _
    // Predicated region
    $region10: #{tpu_custom_call.1} parent=1 // pred_check
      _
    $region11: #{tpu_custom_call.1} parent=1 // pred_check_branch
      %27 = sbr.rel (0) target = $region13
    $region12: #{tpu_custom_call.1} parent=1 // pred_region
      _
    $region13: #{tpu_custom_call.1} parent=1 // pred_fallthru
      _
    // Predicated region
    $region14: #{tpu_custom_call.1} parent=1 // pred_check
      _
    $region15: #{tpu_custom_call.1} parent=1 // pred_check_branch
      %29 = sbr.rel (0) target = $region17
    $region16: #{tpu_custom_call.1} parent=1 // pred_region
      %s31 = ssub.s32 16384, 16384
      %32 = vsyncadd [#allocation6], %s31
      %s33 = sshll.u32 [#allocation5], 4
      %s34 = int_to_ptr.vmem [resolvable:$true] %s33
      %39 = dma.hbm_to_vmem [thread:$0]  %s3, 16384, %s34, [#allocation6], 256, 256, 16
    $region17: #{tpu_custom_call.1} parent=1 // pred_fallthru
      _
    // Predicated region
    $region18: #{tpu_custom_call.1} parent=1 // pred_check
      _
    $region19: #{tpu_custom_call.1} parent=1 // pred_check_branch
      %41 = sbr.rel (0) target = $region21
    $region20: #{tpu_custom_call.1} parent=1 // pred_region
      %42 = dma.done [#allocation3], 1024
    $region21: #{tpu_custom_call.1} parent=1 // pred_fallthru
      _
    // Predicated region
    $region22: #{tpu_custom_call.1} parent=1 // pred_check
      _
    $region23: #{tpu_custom_call.1} parent=1 // pred_check_branch
      %44 = sbr.rel (0) target = $region25
    $region24: #{tpu_custom_call.1} parent=1 // pred_region
      %45 = dma.done [#allocation6], 16384
    $region25: #{tpu_custom_call.1} parent=1 // pred_fallthru
      _
    %v46 = vld [vmem:[#allocation2] sm:$0xff]
    %v47 = vld [vmem:[#allocation2 + $0x8] sm:$0xff]
    %v48 = vld [vmem:[#allocation2 + $0x10] sm:$0xff]
    %v49 = vld [vmem:[#allocation2 + $0x18] sm:$0xff]
    %v50 = vld [vmem:[#allocation2 + $0x20] sm:$0xff]
    %v51 = vld [vmem:[#allocation2 + $0x28] sm:$0xff]
    %v52 = vld [vmem:[#allocation2 + $0x30] sm:$0xff]
    %v53 = vld [vmem:[#allocation2 + $0x38] sm:$0xff]
    %v54 = vadd.f32 %v46, %v47
    %55 = vadd.xlane.f32.xlu0 %v54
    %v56 = vpop.xlane.xlu0 %55
    %v57 = vadd.f32 %v48, %v49
    %58 = vadd.xlane.f32.xlu0 %v57
    %v59 = vpop.xlane.xlu0 %58
    %v60 = vadd.f32 %v50, %v51
    %61 = vadd.xlane.f32.xlu0 %v60
    %v62 = vpop.xlane.xlu0 %61
    %v63 = vadd.f32 %v52, %v53
    %64 = vadd.xlane.f32.xlu0 %v63
    %v65 = vpop.xlane.xlu0 %64
    %v66 = vrcp.pop 256.0
    %v67 = vmul.f32 %v56, %v66
    %v68 = vmul.f32 %v59, %v66
    %v69 = vmul.f32 %v62, %v66
    %v70 = vmul.f32 %v65, %v66
    %v71 = vmax.f32 %v46, %v47
    %72 = vmax.xlane.f32.xlu0 %v71
    %v73 = vpop.xlane.xlu0 %72
    %v74 = vmax.f32 %v48, %v49
    %75 = vmax.xlane.f32.xlu0 %v74
    %v76 = vpop.xlane.xlu0 %75
    %v77 = vmax.f32 %v50, %v51
    %78 = vmax.xlane.f32.xlu0 %v77
    %v79 = vpop.xlane.xlu0 %78
    %v80 = vmax.f32 %v52, %v53
    %81 = vmax.xlane.f32.xlu0 %v80
    %v82 = vpop.xlane.xlu0 %81
    %v87 = vlaneseq
    %v88 = vand.u32 %v87, 127
    %v89 = vlaneseq
    %v90 = vshrl.u32 %v89, 7
    %v91 = vsub.s32 %v88, %v90
    %v92 = vrot.slane %v67, %v91
    %v93 = vadd.s32 %v88, 4294967288
    %v94 = vlaneseq
    %v95 = vshrl.u32 %v94, 7
    %v96 = vsub.s32 %v93, %v95
    %v97 = vrot.slane %v68, %v96
    %vm98 = vcmask 130112
    %v99 = vsel %vm98, %v97, %v92
    %v100 = vlaneseq
    %v101 = vshrl.u32 %v100, 7
    %v102 = vsub.s32 %v88, %v101
    %v103 = vrot.slane %v69, %v102
    %v104 = vlaneseq
    %v105 = vshrl.u32 %v104, 7
    %v106 = vsub.s32 %v93, %v105
    %v107 = vrot.slane %v70, %v106
    %v108 = vsel %vm98, %v107, %v103
    %vm109 = vcmask 1041409
    %v110 = vsel %vm109, %v108, %v99
    %v116 = vlaneseq
    %v117 = vshrl.u32 %v116, 7
    %v118 = vsub.s32 %v88, %v117
    %v119 = vrot.slane %v73, %v118
    %v120 = vlaneseq
    %v121 = vshrl.u32 %v120, 7
    %v122 = vsub.s32 %v93, %v121
    %v123 = vrot.slane %v76, %v122
    %v124 = vsel %vm98, %v123, %v119
    %v125 = vlaneseq
    %v126 = vshrl.u32 %v125, 7
    %v127 = vsub.s32 %v88, %v126
    %v128 = vrot.slane %v79, %v127
    %v129 = vlaneseq
    %v130 = vshrl.u32 %v129, 7
    %v131 = vsub.s32 %v93, %v130
    %v132 = vrot.slane %v82, %v131
    %v133 = vsel %vm98, %v132, %v128
    %vm134 = vcmask 1043459
    %v135 = vsel %vm134, %v133, %v124
    %vm137 = vcmask 1041408
    %v138 = vsel %vm137, %v110, %v135
    %v139 = vld [vmem:[%s1] sm:$0xff]
    %v140 = vld [vmem:[%s1 + $0x8] sm:$0xff]
    %vm141 = vcmask 130048
    %v143 = vsel %vm141, %v138, 0
    %145 = vmatprep.subr.mxu0 0.0
    %146 = vmatpush1.msra.mxu0 %v139
    %147 = vmatprep.subr.mxu0 0.0
    %148 = vmatpush1.msra.mxu0 %v140
    %149 = vmatprep.subr.mxu0 0.0
    %150 = vmatpush1.msra.mxu0 0.0
    %151 = vmatprep.subr.mxu0 0.0
    %152 = vmatpush1.msra.mxu0 0.0
    %153 = vmatprep.subr.mxu0 0.0
    %154 = vmatpush1.msra.mxu0 0.0
    %155 = vmatprep.subr.mxu0 0.0
    %156 = vmatpush1.msra.mxu0 0.0
    %157 = vmatprep.subr.mxu0 0.0
    %158 = vmatpush1.msra.mxu0 0.0
    %159 = vmatprep.subr.mxu0 0.0
    %160 = vmatpush1.msra.mxu0 0.0
    %161 = vmatprep.subr.mxu0 0.0
    %162 = vmatpush1.msra.mxu0 0.0
    %163 = vmatprep.subr.mxu0 0.0
    %164 = vmatpush1.msra.mxu0 0.0
    %165 = vmatprep.subr.mxu0 0.0
    %166 = vmatpush1.msra.mxu0 0.0
    %167 = vmatprep.subr.mxu0 0.0
    %168 = vmatpush1.msra.mxu0 0.0
    %169 = vmatprep.subr.mxu0 0.0
    %170 = vmatpush1.msra.mxu0 0.0
    %171 = vmatprep.subr.mxu0 0.0
    %172 = vmatpush1.msra.mxu0 0.0
    %173 = vmatprep.subr.mxu0 0.0
    %174 = vmatpush1.msra.mxu0 0.0
    %175 = vmatprep.subr.mxu0 0.0
    %176 = vmatpush1.msra.mxu0 0.0
    %177 = vmatprep.subr.mxu0 0.0
    %178 = vmatpush1.msra.mxu0 0.0
    %179 = vmatprep.subr.mxu0 0.0
    %180 = vmatpush1.msra.mxu0 0.0
    %181 = vmatprep.subr.mxu0 0.0
    %182 = vmatpush1.msra.mxu0 0.0
    %183 = vmatprep.subr.mxu0 0.0
    %184 = vmatpush1.msra.mxu0 0.0
    %185 = vmatprep.subr.mxu0 0.0
    %186 = vmatpush1.msra.mxu0 0.0
    %187 = vmatprep.subr.mxu0 0.0
    %188 = vmatpush1.msra.mxu0 0.0
    %189 = vmatprep.subr.mxu0 0.0
    %190 = vmatpush1.msra.mxu0 0.0
    %191 = vmatprep.subr.mxu0 0.0
    %192 = vmatpush1.msra.mxu0 0.0
    %193 = vmatprep.subr.mxu0 0.0
    %194 = vmatpush1.msra.mxu0 0.0
    %195 = vmatprep.subr.mxu0 0.0
    %196 = vmatpush1.msra.mxu0 0.0
    %197 = vmatprep.subr.mxu0 0.0
    %198 = vmatpush1.msra.mxu0 0.0
    %199 = vmatprep.subr.mxu0 0.0
    %200 = vmatpush1.msra.mxu0 0.0
    %201 = vmatprep.subr.mxu0 0.0
    %202 = vmatpush1.msra.mxu0 0.0
    %203 = vmatprep.subr.mxu0 0.0
    %204 = vmatpush1.msra.mxu0 0.0
    %205 = vmatprep.subr.mxu0 0.0
    %206 = vmatpush1.msra.mxu0 0.0
    %207 = vmatprep.subr.mxu0 0.0
    %208 = vmatpush1.msra.mxu0 0.0
    %209 = vmatprep.mubr.f32.mxu0 0.0
    %210 = vmatmul.mubr.f32.gmra.mrb[0].mxu0 %v143
    %v211 = vpop.f32.mrb[0].mxu0
    %v212 = vadd.f32 0.0, %v211
    %v213 = vpop.f32.mrb[0].mxu0
    %214 = vdwg.mxu0
    %v215 = vmax.f32 %v212, 0.0
    %v216 = vld [vmem:[%s2] sm:$0x3]
    %vm217 = vcmask 15360
    %v219 = vsel %vm217, %v215, 0
    %v222 = vsel %vm137, %v216, 0
    %224 = vmatprep.subr.mxu0 0.0
    %225 = vmatpush1.msra.mxu0 %v222
    %226 = vmatprep.subr.mxu0 0.0
    %227 = vmatpush1.msra.mxu0 0.0
    %228 = vmatprep.subr.mxu0 0.0
    %229 = vmatpush1.msra.mxu0 0.0
    %230 = vmatprep.subr.mxu0 0.0
    %231 = vmatpush1.msra.mxu0 0.0
    %232 = vmatprep.subr.mxu0 0.0
    %233 = vmatpush1.msra.mxu0 0.0
    %234 = vmatprep.subr.mxu0 0.0
    %235 = vmatpush1.msra.mxu0 0.0
    %236 = vmatprep.subr.mxu0 0.0
    %237 = vmatpush1.msra.mxu0 0.0
    %238 = vmatprep.subr.mxu0 0.0
    %239 = vmatpush1.msra.mxu0 0.0
    %240 = vmatprep.subr.mxu0 0.0
    %241 = vmatpush1.msra.mxu0 0.0
    %242 = vmatprep.subr.mxu0 0.0
    %243 = vmatpush1.msra.mxu0 0.0
    %244 = vmatprep.subr.mxu0 0.0
    %245 = vmatpush1.msra.mxu0 0.0
    %246 = vmatprep.subr.mxu0 0.0
    %247 = vmatpush1.msra.mxu0 0.0
    %248 = vmatprep.subr.mxu0 0.0
    %249 = vmatpush1.msra.mxu0 0.0
    %250 = vmatprep.subr.mxu0 0.0
    %251 = vmatpush1.msra.mxu0 0.0
    %252 = vmatprep.subr.mxu0 0.0
    %253 = vmatpush1.msra.mxu0 0.0
    %254 = vmatprep.subr.mxu0 0.0
    %255 = vmatpush1.msra.mxu0 0.0
    %256 = vmatprep.subr.mxu0 0.0
    %257 = vmatpush1.msra.mxu0 0.0
    %258 = vmatprep.subr.mxu0 0.0
    %259 = vmatpush1.msra.mxu0 0.0
    %260 = vmatprep.subr.mxu0 0.0
    %261 = vmatpush1.msra.mxu0 0.0
    %262 = vmatprep.subr.mxu0 0.0
    %263 = vmatpush1.msra.mxu0 0.0
    %264 = vmatprep.subr.mxu0 0.0
    %265 = vmatpush1.msra.mxu0 0.0
    %266 = vmatprep.subr.mxu0 0.0
    %267 = vmatpush1.msra.mxu0 0.0
    %268 = vmatprep.subr.mxu0 0.0
    %269 = vmatpush1.msra.mxu0 0.0
    %270 = vmatprep.subr.mxu0 0.0
    %271 = vmatpush1.msra.mxu0 0.0
    %272 = vmatprep.subr.mxu0 0.0
    %273 = vmatpush1.msra.mxu0 0.0
    %274 = vmatprep.subr.mxu0 0.0
    %275 = vmatpush1.msra.mxu0 0.0
    %276 = vmatprep.subr.mxu0 0.0
    %277 = vmatpush1.msra.mxu0 0.0
    %278 = vmatprep.subr.mxu0 0.0
    %279 = vmatpush1.msra.mxu0 0.0
    %280 = vmatprep.subr.mxu0 0.0
    %281 = vmatpush1.msra.mxu0 0.0
    %282 = vmatprep.subr.mxu0 0.0
    %283 = vmatpush1.msra.mxu0 0.0
    %284 = vmatprep.subr.mxu0 0.0
    %285 = vmatpush1.msra.mxu0 0.0
    %286 = vmatprep.subr.mxu0 0.0
    %287 = vmatpush1.msra.mxu0 0.0
    %288 = vmatprep.mubr.f32.mxu0 0.0
    %289 = vmatmul.mubr.f32.gmra.mrb[0].mxu0 %v219
    %v290 = vpop.f32.mrb[0].mxu0
    %v291 = vadd.f32 0.0, %v290
    %v292 = vpop.f32.mrb[0].mxu0
    %293 = vdwg.mxu0
    %v295 = vrot.slane %v291, 2
    %v297 = vadd.f32 %v291, %v295
    %v298 = vxor.u32 %v297, 2147483648
    %v299 = vmul.f32 %v298, 1.442695
    %v300 = vpow.pop %v299
    %v301 = vadd.f32 %v300, 1.0
    %v302 = vrcp.pop %v301
    %v303 = vmul.f32 1.0, %v302
    %v304 = vlaneseq
    %v305 = vshrl.u32 %v304, 7
    %v306 = vsub.s32 0, %v305
    %v307 = vrot.slane %v303, %v306
    %309 = vbcast.lane.b32.xlu0 %v307, 256
    %v310 = vpop.permute.xlu0 %309
    %s312 = sor.u32 256, 8
    %313 = vbcast.lane.b32.xlu0 %v307, %s312
    %v314 = vpop.permute.xlu0 %313
    %v315 = vlaneseq
    %v316 = vshrl.u32 %v315, 7
    %v317 = vsub.s32 1, %v316
    %v318 = vrot.slane %v303, %v317
    %320 = vbcast.lane.b32.xlu0 %v318, 256
    %v321 = vpop.permute.xlu0 %320
    %s323 = sor.u32 256, 8
    %324 = vbcast.lane.b32.xlu0 %v318, %s323
    %v325 = vpop.permute.xlu0 %324
    %v326 = vmul.f32 %v46, %v310
    %v327 = vmul.f32 %v47, %v310
    %v328 = vmul.f32 %v48, %v314
    %v329 = vmul.f32 %v49, %v314
    %v330 = vmul.f32 %v50, %v321
    %v331 = vmul.f32 %v51, %v321
    %v332 = vmul.f32 %v52, %v325
    %v333 = vmul.f32 %v53, %v325
    %v334 = vadd.f32 %v326, %v328
    %v335 = vrot.slane %v334, 4
    %v336 = vadd.f32 %v334, %v335
    %v337 = vrot.slane %v336, 2
    %v338 = vadd.f32 %v336, %v337
    %v339 = vrot.slane %v338, 1
    %v340 = vadd.f32 %v338, %v339
    %v341 = vadd.f32 %v327, %v329
    %v342 = vrot.slane %v341, 4
    %v343 = vadd.f32 %v341, %v342
    %v344 = vrot.slane %v343, 2
    %v345 = vadd.f32 %v343, %v344
    %v346 = vrot.slane %v345, 1
    %v347 = vadd.f32 %v345, %v346
    %v348 = vadd.f32 %v330, %v332
    %v349 = vrot.slane %v348, 4
    %v350 = vadd.f32 %v348, %v349
    %v351 = vrot.slane %v350, 2
    %v352 = vadd.f32 %v350, %v351
    %v353 = vrot.slane %v352, 1
    %v354 = vadd.f32 %v352, %v353
    %v355 = vadd.f32 %v331, %v333
    %v356 = vrot.slane %v355, 4
    %v357 = vadd.f32 %v355, %v356
    %v358 = vrot.slane %v357, 2
    %v359 = vadd.f32 %v357, %v358
    %v360 = vrot.slane %v359, 1
    %v361 = vadd.f32 %v359, %v360
    %v362 = vrcp.pop 16.0
    %v363 = vmul.f32 %v340, %v362
    %v364 = vmul.f32 %v347, %v362
    %v365 = vmul.f32 %v354, %v362
    %v366 = vmul.f32 %v361, %v362
    %v367 = vmax.f32 %v326, %v328
    %v368 = vrot.slane %v367, 4
    %v369 = vmax.f32 %v367, %v368
    %v370 = vrot.slane %v369, 2
    %v371 = vmax.f32 %v369, %v370
    %v372 = vrot.slane %v371, 1
    %v373 = vmax.f32 %v371, %v372
    %v374 = vmax.f32 %v327, %v329
    %v375 = vrot.slane %v374, 4
    %v376 = vmax.f32 %v374, %v375
    %v377 = vrot.slane %v376, 2
    %v378 = vmax.f32 %v376, %v377
    %v379 = vrot.slane %v378, 1
    %v380 = vmax.f32 %v378, %v379
    %v381 = vmax.f32 %v330, %v332
    %v382 = vrot.slane %v381, 4
    %v383 = vmax.f32 %v381, %v382
    %v384 = vrot.slane %v383, 2
    %v385 = vmax.f32 %v383, %v384
    %v386 = vrot.slane %v385, 1
    %v387 = vmax.f32 %v385, %v386
    %v388 = vmax.f32 %v331, %v333
    %v389 = vrot.slane %v388, 4
    %v390 = vmax.f32 %v388, %v389
    %v391 = vrot.slane %v390, 2
    %v392 = vmax.f32 %v390, %v391
    %v393 = vrot.slane %v392, 1
    %v394 = vmax.f32 %v392, %v393
    %v395 = vld [vmem:[#allocation5] sm:$0xff]
    %v396 = vld [vmem:[#allocation5 + $0x8] sm:$0xff]
    %v397 = vld [vmem:[#allocation5 + $0x10] sm:$0xff]
    %v398 = vld [vmem:[#allocation5 + $0x18] sm:$0xff]
    %v399 = vld [vmem:[#allocation5 + $0x20] sm:$0xff]
    %v400 = vld [vmem:[#allocation5 + $0x28] sm:$0xff]
    %v401 = vld [vmem:[#allocation5 + $0x30] sm:$0xff]
    %v402 = vld [vmem:[#allocation5 + $0x38] sm:$0xff]
    %v403 = vld [vmem:[#allocation5 + $0x40] sm:$0xff]
    %v404 = vld [vmem:[#allocation5 + $0x48] sm:$0xff]
    %v405 = vld [vmem:[#allocation5 + $0x50] sm:$0xff]
    %v406 = vld [vmem:[#allocation5 + $0x58] sm:$0xff]
    %v407 = vld [vmem:[#allocation5 + $0x60] sm:$0xff]
    %v408 = vld [vmem:[#allocation5 + $0x68] sm:$0xff]
    %v409 = vld [vmem:[#allocation5 + $0x70] sm:$0xff]
    %v410 = vld [vmem:[#allocation5 + $0x78] sm:$0xff]
    %v411 = vld [vmem:[#allocation5 + $0x80] sm:$0xff]
    %v412 = vld [vmem:[#allocation5 + $0x88] sm:$0xff]
    %v413 = vld [vmem:[#allocation5 + $0x90] sm:$0xff]
    %v414 = vld [vmem:[#allocation5 + $0x98] sm:$0xff]
    %v415 = vld [vmem:[#allocation5 + $0xa0] sm:$0xff]
    %v416 = vld [vmem:[#allocation5 + $0xa8] sm:$0xff]
    %v417 = vld [vmem:[#allocation5 + $0xb0] sm:$0xff]
    %v418 = vld [vmem:[#allocation5 + $0xb8] sm:$0xff]
    %v419 = vld [vmem:[#allocation5 + $0xc0] sm:$0xff]
    %v420 = vld [vmem:[#allocation5 + $0xc8] sm:$0xff]
    %v421 = vld [vmem:[#allocation5 + $0xd0] sm:$0xff]
    %v422 = vld [vmem:[#allocation5 + $0xd8] sm:$0xff]
    %v423 = vld [vmem:[#allocation5 + $0xe0] sm:$0xff]
    %v424 = vld [vmem:[#allocation5 + $0xe8] sm:$0xff]
    %v425 = vld [vmem:[#allocation5 + $0xf0] sm:$0xff]
    %v426 = vld [vmem:[#allocation5 + $0xf8] sm:$0xff]
    %v427 = vld [vmem:[#allocation5 + $0x100] sm:$0xff]
    %v428 = vld [vmem:[#allocation5 + $0x108] sm:$0xff]
    %v429 = vld [vmem:[#allocation5 + $0x110] sm:$0xff]
    %v430 = vld [vmem:[#allocation5 + $0x118] sm:$0xff]
    %v431 = vld [vmem:[#allocation5 + $0x120] sm:$0xff]
    %v432 = vld [vmem:[#allocation5 + $0x128] sm:$0xff]
    %v433 = vld [vmem:[#allocation5 + $0x130] sm:$0xff]
    %v434 = vld [vmem:[#allocation5 + $0x138] sm:$0xff]
    %v435 = vld [vmem:[#allocation5 + $0x140] sm:$0xff]
    %v436 = vld [vmem:[#allocation5 + $0x148] sm:$0xff]
    %v437 = vld [vmem:[#allocation5 + $0x150] sm:$0xff]
    %v438 = vld [vmem:[#allocation5 + $0x158] sm:$0xff]
    %v439 = vld [vmem:[#allocation5 + $0x160] sm:$0xff]
    %v440 = vld [vmem:[#allocation5 + $0x168] sm:$0xff]
    %v441 = vld [vmem:[#allocation5 + $0x170] sm:$0xff]
    %v442 = vld [vmem:[#allocation5 + $0x178] sm:$0xff]
    %v443 = vld [vmem:[#allocation5 + $0x180] sm:$0xff]
    %v444 = vld [vmem:[#allocation5 + $0x188] sm:$0xff]
    %v445 = vld [vmem:[#allocation5 + $0x190] sm:$0xff]
    %v446 = vld [vmem:[#allocation5 + $0x198] sm:$0xff]
    %v447 = vld [vmem:[#allocation5 + $0x1a0] sm:$0xff]
    %v448 = vld [vmem:[#allocation5 + $0x1a8] sm:$0xff]
    %v449 = vld [vmem:[#allocation5 + $0x1b0] sm:$0xff]
    %v450 = vld [vmem:[#allocation5 + $0x1b8] sm:$0xff]
    %v451 = vld [vmem:[#allocation5 + $0x1c0] sm:$0xff]
    %v452 = vld [vmem:[#allocation5 + $0x1c8] sm:$0xff]
    %v453 = vld [vmem:[#allocation5 + $0x1d0] sm:$0xff]
    %v454 = vld [vmem:[#allocation5 + $0x1d8] sm:$0xff]
    %v455 = vld [vmem:[#allocation5 + $0x1e0] sm:$0xff]
    %v456 = vld [vmem:[#allocation5 + $0x1e8] sm:$0xff]
    %v457 = vld [vmem:[#allocation5 + $0x1f0] sm:$0xff]
    %v458 = vld [vmem:[#allocation5 + $0x1f8] sm:$0xff]
    %s459 = scalar_lea.vmem [#allocation5], 512
    %v460 = vld [vmem:[%s459] sm:$0xff]
    %v461 = vld [vmem:[%s459 + $0x8] sm:$0xff]
    %v462 = vld [vmem:[%s459 + $0x10] sm:$0xff]
    %v463 = vld [vmem:[%s459 + $0x18] sm:$0xff]
    %v464 = vld [vmem:[%s459 + $0x20] sm:$0xff]
    %v465 = vld [vmem:[%s459 + $0x28] sm:$0xff]
    %v466 = vld [vmem:[%s459 + $0x30] sm:$0xff]
    %v467 = vld [vmem:[%s459 + $0x38] sm:$0xff]
    %v468 = vld [vmem:[%s459 + $0x40] sm:$0xff]
    %v469 = vld [vmem:[%s459 + $0x48] sm:$0xff]
    %v470 = vld [vmem:[%s459 + $0x50] sm:$0xff]
    %v471 = vld [vmem:[%s459 + $0x58] sm:$0xff]
    %v472 = vld [vmem:[%s459 + $0x60] sm:$0xff]
    %v473 = vld [vmem:[%s459 + $0x68] sm:$0xff]
    %v474 = vld [vmem:[%s459 + $0x70] sm:$0xff]
    %v475 = vld [vmem:[%s459 + $0x78] sm:$0xff]
    %v476 = vld [vmem:[%s459 + $0x80] sm:$0xff]
    %v477 = vld [vmem:[%s459 + $0x88] sm:$0xff]
    %v478 = vld [vmem:[%s459 + $0x90] sm:$0xff]
    %v479 = vld [vmem:[%s459 + $0x98] sm:$0xff]
    %v480 = vld [vmem:[%s459 + $0xa0] sm:$0xff]
    %v481 = vld [vmem:[%s459 + $0xa8] sm:$0xff]
    %v482 = vld [vmem:[%s459 + $0xb0] sm:$0xff]
    %v483 = vld [vmem:[%s459 + $0xb8] sm:$0xff]
    %v484 = vld [vmem:[%s459 + $0xc0] sm:$0xff]
    %v485 = vld [vmem:[%s459 + $0xc8] sm:$0xff]
    %v486 = vld [vmem:[%s459 + $0xd0] sm:$0xff]
    %v487 = vld [vmem:[%s459 + $0xd8] sm:$0xff]
    %v488 = vld [vmem:[%s459 + $0xe0] sm:$0xff]
    %v489 = vld [vmem:[%s459 + $0xe8] sm:$0xff]
    %v490 = vld [vmem:[%s459 + $0xf0] sm:$0xff]
    %v491 = vld [vmem:[%s459 + $0xf8] sm:$0xff]
    %v492 = vld [vmem:[%s459 + $0x100] sm:$0xff]
    %v493 = vld [vmem:[%s459 + $0x108] sm:$0xff]
    %v494 = vld [vmem:[%s459 + $0x110] sm:$0xff]
    %v495 = vld [vmem:[%s459 + $0x118] sm:$0xff]
    %v496 = vld [vmem:[%s459 + $0x120] sm:$0xff]
    %v497 = vld [vmem:[%s459 + $0x128] sm:$0xff]
    %v498 = vld [vmem:[%s459 + $0x130] sm:$0xff]
    %v499 = vld [vmem:[%s459 + $0x138] sm:$0xff]
    %v500 = vld [vmem:[%s459 + $0x140] sm:$0xff]
    %v501 = vld [vmem:[%s459 + $0x148] sm:$0xff]
    %v502 = vld [vmem:[%s459 + $0x150] sm:$0xff]
    %v503 = vld [vmem:[%s459 + $0x158] sm:$0xff]
    %v504 = vld [vmem:[%s459 + $0x160] sm:$0xff]
    %v505 = vld [vmem:[%s459 + $0x168] sm:$0xff]
    %v506 = vld [vmem:[%s459 + $0x170] sm:$0xff]
    %v507 = vld [vmem:[%s459 + $0x178] sm:$0xff]
    %v508 = vld [vmem:[%s459 + $0x180] sm:$0xff]
    %v509 = vld [vmem:[%s459 + $0x188] sm:$0xff]
    %v510 = vld [vmem:[%s459 + $0x190] sm:$0xff]
    %v511 = vld [vmem:[%s459 + $0x198] sm:$0xff]
    %v512 = vld [vmem:[%s459 + $0x1a0] sm:$0xff]
    %v513 = vld [vmem:[%s459 + $0x1a8] sm:$0xff]
    %v514 = vld [vmem:[%s459 + $0x1b0] sm:$0xff]
    %v515 = vld [vmem:[%s459 + $0x1b8] sm:$0xff]
    %v516 = vld [vmem:[%s459 + $0x1c0] sm:$0xff]
    %v517 = vld [vmem:[%s459 + $0x1c8] sm:$0xff]
    %v518 = vld [vmem:[%s459 + $0x1d0] sm:$0xff]
    %v519 = vld [vmem:[%s459 + $0x1d8] sm:$0xff]
    %v520 = vld [vmem:[%s459 + $0x1e0] sm:$0xff]
    %v521 = vld [vmem:[%s459 + $0x1e8] sm:$0xff]
    %v522 = vld [vmem:[%s459 + $0x1f0] sm:$0xff]
    %v523 = vld [vmem:[%s459 + $0x1f8] sm:$0xff]
    %v528 = vsel %vm109, %v387, %v373
    %v529 = vsel %vm109, %v394, %v380
    %532 = vmatprep.subr.mxu0 %v461
    %533 = vmatpush1.msra.mxu0 %v460
    %534 = vmatprep.subr.mxu0 %v463
    %535 = vmatpush1.msra.mxu0 %v462
    %536 = vmatprep.subr.mxu0 %v465
    %537 = vmatpush1.msra.mxu0 %v464
    %538 = vmatprep.subr.mxu0 %v467
    %539 = vmatpush1.msra.mxu0 %v466
    %540 = vmatprep.subr.mxu0 %v469
    %541 = vmatpush1.msra.mxu0 %v468
    %542 = vmatprep.subr.mxu0 %v471
    %543 = vmatpush1.msra.mxu0 %v470
    %544 = vmatprep.subr.mxu0 %v473
    %545 = vmatpush1.msra.mxu0 %v472
    %546 = vmatprep.subr.mxu0 %v475
    %547 = vmatpush1.msra.mxu0 %v474
    %548 = vmatprep.subr.mxu0 %v477
    %549 = vmatpush1.msra.mxu0 %v476
    %550 = vmatprep.subr.mxu0 %v479
    %551 = vmatpush1.msra.mxu0 %v478
    %552 = vmatprep.subr.mxu0 %v481
    %553 = vmatpush1.msra.mxu0 %v480
    %554 = vmatprep.subr.mxu0 %v483
    %555 = vmatpush1.msra.mxu0 %v482
    %556 = vmatprep.subr.mxu0 %v485
    %557 = vmatpush1.msra.mxu0 %v484
    %558 = vmatprep.subr.mxu0 %v487
    %559 = vmatpush1.msra.mxu0 %v486
    %560 = vmatprep.subr.mxu0 %v489
    %561 = vmatpush1.msra.mxu0 %v488
    %562 = vmatprep.subr.mxu0 %v491
    %563 = vmatpush1.msra.mxu0 %v490
    %564 = vmatprep.subr.mxu0 %v493
    %565 = vmatpush1.msra.mxu0 %v492
    %566 = vmatprep.subr.mxu0 %v495
    %567 = vmatpush1.msra.mxu0 %v494
    %568 = vmatprep.subr.mxu0 %v497
    %569 = vmatpush1.msra.mxu0 %v496
    %570 = vmatprep.subr.mxu0 %v499
    %571 = vmatpush1.msra.mxu0 %v498
    %572 = vmatprep.subr.mxu0 %v501
    %573 = vmatpush1.msra.mxu0 %v500
    %574 = vmatprep.subr.mxu0 %v503
    %575 = vmatpush1.msra.mxu0 %v502
    %576 = vmatprep.subr.mxu0 %v505
    %577 = vmatpush1.msra.mxu0 %v504
    %578 = vmatprep.subr.mxu0 %v507
    %579 = vmatpush1.msra.mxu0 %v506
    %580 = vmatprep.subr.mxu0 %v509
    %581 = vmatpush1.msra.mxu0 %v508
    %582 = vmatprep.subr.mxu0 %v511
    %583 = vmatpush1.msra.mxu0 %v510
    %584 = vmatprep.subr.mxu0 %v513
    %585 = vmatpush1.msra.mxu0 %v512
    %586 = vmatprep.subr.mxu0 %v515
    %587 = vmatpush1.msra.mxu0 %v514
    %588 = vmatprep.subr.mxu0 %v517
    %589 = vmatpush1.msra.mxu0 %v516
    %590 = vmatprep.subr.mxu0 %v519
    %591 = vmatpush1.msra.mxu0 %v518
    %592 = vmatprep.subr.mxu0 %v521
    %593 = vmatpush1.msra.mxu0 %v520
    %594 = vmatprep.subr.mxu0 %v523
    %595 = vmatpush1.msra.mxu0 %v522
    %596 = vmatprep.mubr.f32.mxu0 %v529
    %597 = vmatmul.mubr.f32.gmra.mrb[0].mxu0 %v528
    %v598 = vpop.f32.mrb[0].mxu0
    %v599 = vadd.f32 0.0, %v598
    %v600 = vpop.f32.mrb[0].mxu0
    %v601 = vadd.f32 0.0, %v600
    %602 = vdwg.mxu0
    %v607 = vsel %vm109, %v365, %v363
    %v608 = vsel %vm109, %v366, %v364
    %611 = vmatprep.subr.mxu0 %v396
    %612 = vmatpush1.msra.mxu0 %v395
    %613 = vmatprep.subr.mxu0 %v398
    %614 = vmatpush1.msra.mxu0 %v397
    %615 = vmatprep.subr.mxu0 %v400
    %616 = vmatpush1.msra.mxu0 %v399
    %617 = vmatprep.subr.mxu0 %v402
    %618 = vmatpush1.msra.mxu0 %v401
    %619 = vmatprep.subr.mxu0 %v404
    %620 = vmatpush1.msra.mxu0 %v403
    %621 = vmatprep.subr.mxu0 %v406
    %622 = vmatpush1.msra.mxu0 %v405
    %623 = vmatprep.subr.mxu0 %v408
    %624 = vmatpush1.msra.mxu0 %v407
    %625 = vmatprep.subr.mxu0 %v410
    %626 = vmatpush1.msra.mxu0 %v409
    %627 = vmatprep.subr.mxu0 %v412
    %628 = vmatpush1.msra.mxu0 %v411
    %629 = vmatprep.subr.mxu0 %v414
    %630 = vmatpush1.msra.mxu0 %v413
    %631 = vmatprep.subr.mxu0 %v416
    %632 = vmatpush1.msra.mxu0 %v415
    %633 = vmatprep.subr.mxu0 %v418
    %634 = vmatpush1.msra.mxu0 %v417
    %635 = vmatprep.subr.mxu0 %v420
    %636 = vmatpush1.msra.mxu0 %v419
    %637 = vmatprep.subr.mxu0 %v422
    %638 = vmatpush1.msra.mxu0 %v421
    %639 = vmatprep.subr.mxu0 %v424
    %640 = vmatpush1.msra.mxu0 %v423
    %641 = vmatprep.subr.mxu0 %v426
    %642 = vmatpush1.msra.mxu0 %v425
    %643 = vmatprep.subr.mxu0 %v428
    %644 = vmatpush1.msra.mxu0 %v427
    %645 = vmatprep.subr.mxu0 %v430
    %646 = vmatpush1.msra.mxu0 %v429
    %647 = vmatprep.subr.mxu0 %v432
    %648 = vmatpush1.msra.mxu0 %v431
    %649 = vmatprep.subr.mxu0 %v434
    %650 = vmatpush1.msra.mxu0 %v433
    %651 = vmatprep.subr.mxu0 %v436
    %652 = vmatpush1.msra.mxu0 %v435
    %653 = vmatprep.subr.mxu0 %v438
    %654 = vmatpush1.msra.mxu0 %v437
    %655 = vmatprep.subr.mxu0 %v440
    %656 = vmatpush1.msra.mxu0 %v439
    %657 = vmatprep.subr.mxu0 %v442
    %658 = vmatpush1.msra.mxu0 %v441
    %659 = vmatprep.subr.mxu0 %v444
    %660 = vmatpush1.msra.mxu0 %v443
    %661 = vmatprep.subr.mxu0 %v446
    %662 = vmatpush1.msra.mxu0 %v445
    %663 = vmatprep.subr.mxu0 %v448
    %664 = vmatpush1.msra.mxu0 %v447
    %665 = vmatprep.subr.mxu0 %v450
    %666 = vmatpush1.msra.mxu0 %v449
    %667 = vmatprep.subr.mxu0 %v452
    %668 = vmatpush1.msra.mxu0 %v451
    %669 = vmatprep.subr.mxu0 %v454
    %670 = vmatpush1.msra.mxu0 %v453
    %671 = vmatprep.subr.mxu0 %v456
    %672 = vmatpush1.msra.mxu0 %v455
    %673 = vmatprep.subr.mxu0 %v458
    %674 = vmatpush1.msra.mxu0 %v457
    %675 = vmatprep.mubr.f32.mxu0 %v608
    %676 = vmatmul.mubr.f32.gmra.mrb[0].mxu0 %v607
    %v677 = vpop.f32.mrb[0].mxu0
    %v678 = vadd.f32 %v599, %v677
    %v679 = vpop.f32.mrb[0].mxu0
    %v680 = vadd.f32 %v601, %v679
    %681 = vdwg.mxu0
    %v682 = vxor.u32 %v678, 2147483648
    %v683 = vxor.u32 %v680, 2147483648
    %v684 = vmul.f32 %v682, 1.442695
    %v685 = vpow.pop %v684
    %v686 = vmul.f32 %v683, 1.442695
    %v687 = vpow.pop %v686
    %v688 = vadd.f32 %v685, 1.0
    %v689 = vadd.f32 %v687, 1.0
    %v690 = vrcp.pop %v688
    %v691 = vmul.f32 1.0, %v690
    %v692 = vrcp.pop %v689
    %v693 = vmul.f32 1.0, %v692
    %v696 = vcombine.low %v691, %v693
    %v698 = vunpack.c.l.s4 1966171168
    %v699 = vunpack.c.0.s8 %v698
    %v700 = vlaneseq
    %v701 = vshrl.u32 %v700, 7
    %v702 = vsub.s32 %v699, %v701
    %v703 = vrot.slane %v696, %v702
    %v704 = vcombine.high %v703, %v703
    %v706 = vunpack.c.l.s4 1966171168
    %v707 = vunpack.c.0.s8 %v706
    %v708 = vlaneseq
    %v709 = vshrl.u32 %v708, 7
    %v710 = vsub.s32 %v707, %v709
    %v711 = vrot.slane %v703, %v710
    %v713 = vunpack.c.l.s4 1966171168
    %v714 = vunpack.c.0.s8 %v713
    %v715 = vlaneseq
    %v716 = vshrl.u32 %v715, 7
    %v717 = vsub.s32 %v714, %v716
    %v718 = vrot.slane %v704, %v717
    %v719 = vlaneseq
    %v720 = vshrl.u32 %v719, 7
    %v721 = vsub.s32 0, %v720
    %v722 = vrot.slane %v711, %v721
    %v723 = vlaneseq
    %v724 = vshrl.u32 %v723, 7
    %v725 = vsub.s32 1, %v724
    %v726 = vrot.slane %v711, %v725
    %v727 = vlaneseq
    %v728 = vshrl.u32 %v727, 7
    %v729 = vsub.s32 0, %v728
    %v730 = vrot.slane %v718, %v729
    %v731 = vlaneseq
    %v732 = vshrl.u32 %v731, 7
    %v733 = vsub.s32 1, %v732
    %v734 = vrot.slane %v718, %v733
    %v739 = vmul.f32 %v326, %v722
    %v740 = vmul.f32 %v327, %v726
    %v741 = vmul.f32 %v328, %v722
    %v742 = vmul.f32 %v329, %v726
    %v743 = vmul.f32 %v330, %v730
    %v744 = vmul.f32 %v331, %v734
    %v745 = vmul.f32 %v332, %v730
    %v746 = vmul.f32 %v333, %v734
    %747 = vst [vmem:[#allocation7] sm:$0xff] %v739
    %748 = vst [vmem:[#allocation7 + $0x8] sm:$0xff] %v740
    %749 = vst [vmem:[#allocation7 + $0x10] sm:$0xff] %v741
    %750 = vst [vmem:[#allocation7 + $0x18] sm:$0xff] %v742
    %751 = vst [vmem:[#allocation7 + $0x20] sm:$0xff] %v743
    %752 = vst [vmem:[#allocation7 + $0x28] sm:$0xff] %v744
    %753 = vst [vmem:[#allocation7 + $0x30] sm:$0xff] %v745
    %754 = vst [vmem:[#allocation7 + $0x38] sm:$0xff] %v746
    // Predicated region
    $region26: #{tpu_custom_call.1} parent=1 // pred_check
      _
    $region27: #{tpu_custom_call.1} parent=1 // pred_check_branch
      %756 = sbr.rel (0) target = $region29
    $region28: #{tpu_custom_call.1} parent=1 // pred_region
      %s758 = ssub.s32 1024, 1024
      %759 = vsyncadd [#allocation4], %s758
      %s760 = sshll.u32 [#allocation7], 4
      %s761 = int_to_ptr.vmem [resolvable:$true] %s760
      %766 = dma.vmem_to_hbm [thread:$0]  %s761, 1024, %s4, [#allocation4], 256, 256, 16
    $region29: #{tpu_custom_call.1} parent=1 // pred_fallthru
      _
    // Predicated region
    $region30: #{tpu_custom_call.1} parent=1 // pred_check
      _
    $region31: #{tpu_custom_call.1} parent=1 // pred_check_branch
      %768 = sbr.rel (0) target = $region33
    $region32: #{tpu_custom_call.1} parent=1 // pred_region
      %769 = dma.done [#allocation4], 1024
    $region33: #{tpu_custom_call.1} parent=1 // pred_fallthru
      _
    %770 = vsyncpa [#allocation3], 1
    %771 = vsyncpa [#allocation6], 1
    %772 = vsyncpa [#allocation4], 1

</llo_original>
